<compile_context>
chip_gen: v6e
topology: v6e:2x2x1
jax: 0.10.0
libtpu: 0.0.40
codegen_flags: <defaults>
</compile_context>

<pallas_src>
import functools

import jax
import jax.numpy as jnp
from jax import lax
from jax.experimental import pallas as pl
from jax.experimental.pallas import tpu as pltpu

BN_EPS = 1e-5


# ---------------------------------------------------------------------------
# In-kernel helpers
# ---------------------------------------------------------------------------

def _conv_rows(src_s, w_ref, nb, ho, stride):
    """3x3 conv as 3 row-tap matmuls over a row-padded (NB, rows, W*Cin) scratch.

    Returns an f32 accumulator of shape (NB*Ho, Wo*Cout).  Column taps, column
    padding and column stride are encoded in the banded weights w_ref[kh], so
    the kernel only shifts rows (cheap major/sublane slices).  The chained
    `acc + dot` keeps the accumulation on the MXU result path.
    """
    k = src_s.shape[-1]
    n_out = w_ref.shape[-1]
    acc = jnp.zeros((nb * ho, n_out), jnp.float32)
    for kh in range(3):
        if stride == 1:
            rows = src_s[:, kh:kh + ho, :]
        else:
            rows = src_s[:, pl.ds(kh, ho, stride), :]
        acc = acc + jnp.dot(rows.reshape(nb * ho, k), w_ref[kh],
                            preferred_element_type=jnp.float32)
    return acc


def _basic_block_kernel(*refs, stride, has_downsample):
    if has_downsample:
        (x_ref, w1_ref, b1_ref, w2_ref, b2_ref, wd_ref, bd_ref,
         out_ref, xr_s, rr_s) = refs
    else:
        (x_ref, w1_ref, b1_ref, w2_ref, b2_ref,
         out_ref, xr_s, rr_s) = refs
        wd_ref = bd_ref = None

    nb, h, wc = x_ref.shape          # input rows:  (NB, H,  W*Cin)  bf16
    _, ho, woc = out_ref.shape       # output rows: (NB, Ho, Wo*Cout)

    xv = x_ref[...]

    # ---- stage the row-padded input in bf16 VMEM scratch -------------------
    # Only the two pad rows are zeroed (per step -> megacore-safe); the
    # interior is fully overwritten every step.
    zx = jnp.zeros((nb, 1, wc), xr_s.dtype)
    xr_s[:, 0:1, :] = zx
    xr_s[:, h + 1:h + 2, :] = zx
    xr_s[:, 1:h + 1, :] = xv

    # ---- conv1 (3x3, stride s) + folded bn1 + ReLU --------------------------
    y1 = jnp.maximum(_conv_rows(xr_s, w1_ref, nb, ho, stride) + b1_ref[...], 0.0)

    # ---- keep the (row-padded) conv1 activation in VMEM for conv2 ----------
    zr = jnp.zeros((nb, 1, woc), rr_s.dtype)
    rr_s[:, 0:1, :] = zr
    rr_s[:, ho + 1:ho + 2, :] = zr
    rr_s[:, 1:ho + 1, :] = y1.astype(rr_s.dtype).reshape(nb, ho, woc)

    # ---- conv2 (3x3, stride 1) + folded bn2 ---------------------------------
    y2 = _conv_rows(rr_s, w2_ref, nb, ho, 1) + b2_ref[...]

    # ---- shortcut -----------------------------------------------------------
    if has_downsample:
        xs = xv if stride == 1 else x_ref[:, pl.ds(0, ho, stride), :]
        sc = jnp.dot(xs.reshape(nb * ho, wc), wd_ref[...],
                     preferred_element_type=jnp.float32) + bd_ref[...]
    else:
        sc = xv.reshape(nb * ho, woc).astype(jnp.float32)

    # ---- residual add + final ReLU: lane-dense epilogue, dense bf16 store --
    out = jnp.maximum(y2 + sc, 0.0)
    out_ref[...] = out.astype(out_ref.dtype).reshape(nb, ho, woc)


# ---------------------------------------------------------------------------
# Parameter prep (BN folding + banded conv weights) and wrapper
# ---------------------------------------------------------------------------

def _fold_bn(w, scale):
    """Fold a per-output-channel BN scale into conv weights (f32)."""
    return (w.astype(jnp.float32)
            * scale.astype(jnp.float32).reshape((1,) * (w.ndim - 1) + (-1,)))


def _band3x3(w, w_in, stride, w_out):
    """(3,3,Cin,Cout) taps -> per-kh banded (W_in*Cin, Wo*Cout) matrices (bf16).

    band[kh, w*Cin+ci, wo*Cout+co] = w[kh, kw, ci, co] with kw = w - wo*stride + 1
    when 0 <= kw <= 2, else 0.  Encodes kw taps, column zero-padding and stride.
    """
    _, _, cin, cout = w.shape
    band = jnp.zeros((3, w_in, cin, w_out, cout), jnp.float32)
    for wo in range(w_out):
        for kw in range(3):
            w_col = wo * stride + kw - 1
            if 0 <= w_col < w_in:
                band = band.at[:, w_col, :, wo, :].set(w[:, kw])
    return band.reshape(3, w_in * cin, w_out * cout).astype(jnp.bfloat16)


def _band1x1(wd, w_in, stride, w_out):
    """(Cin,Cout) 1x1/stride-s conv -> banded (W_in*Cin, Wo*Cout) matrix (bf16)."""
    cin, cout = wd.shape
    band = jnp.zeros((w_in, cin, w_out, cout), jnp.float32)
    for wo in range(w_out):
        band = band.at[wo * stride, :, wo, :].set(wd)
    return band.reshape(w_in * cin, w_out * cout).astype(jnp.bfloat16)


def _dense_bias(bias, w_out):
    """(Cout,) bias -> (1, Wo*Cout) f32 vector matching the lane-dense layout."""
    return jnp.tile(bias.astype(jnp.float32), w_out).reshape(1, -1)


def basic_block_forward_nhwc(params, x_nhwc, stride=1, batch_block=None):
    """Fused BasicBlock on NHWC activations; returns (N, Ho, Wo, Cout) bf16."""
    n, h, w, cin = x_nhwc.shape
    cout = params["w1"].shape[-1]
    ho = (h - 1) // stride + 1
    wo = (w - 1) // stride + 1
    has_ds = "wd" in params
    if not has_ds:
        assert cin == cout and stride == 1, (
            "identity shortcut requires in_chan == out_chan and stride == 1")

    # Images per grid step (amortizes ~0.35us/step overhead).  For large
    # batches prefer 4-8 and keep the grid extent a multiple of 2 for v7x.
    nb = batch_block or max(d for d in range(1, min(n, 8) + 1) if n % d == 0)
    assert n % nb == 0

    x = x_nhwc.astype(jnp.bfloat16).reshape(n, h, w * cin)

    w1b = _band3x3(_fold_bn(params["w1"], params["bn1_scale"]), w, stride, wo)
    w2b = _band3x3(_fold_bn(params["w2"], params["bn2_scale"]), wo, 1, wo)
    b1 = _dense_bias(params["bn1_bias"], wo)
    b2 = _dense_bias(params["bn2_bias"], wo)

    args = [x, w1b, b1, w2b, b2]
    in_specs = [
        pl.BlockSpec((nb, h, w * cin), lambda i: (i, 0, 0)),
        # Grid-invariant weights/biases below (index_map constant in i).
        pl.BlockSpec((3, w * cin, wo * cout), lambda i: (0, 0, 0)),
        pl.BlockSpec((1, wo * cout), lambda i: (0, 0)),
        pl.BlockSpec((3, wo * cout, wo * cout), lambda i: (0, 0, 0)),
        pl.BlockSpec((1, wo * cout), lambda i: (0, 0)),
    ]
    if has_ds:
        wdb = _band1x1(_fold_bn(params["wd"], params["bnd_scale"]), w, stride, wo)
        bd = _dense_bias(params["bnd_bias"], wo)
        args += [wdb, bd]
        in_specs += [
            pl.BlockSpec((w * cin, wo * cout), lambda i: (0, 0)),
            pl.BlockSpec((1, wo * cout), lambda i: (0, 0)),
        ]

    kernel = functools.partial(_basic_block_kernel, stride=stride,
                               has_downsample=has_ds)
    out = pl.pallas_call(
        kernel,
        out_shape=jax.ShapeDtypeStruct((n, ho, wo * cout), jnp.bfloat16),
        grid=(n // nb,),
        in_specs=in_specs,
        out_specs=pl.BlockSpec((nb, ho, wo * cout), lambda i: (i, 0, 0)),
        scratch_shapes=[
            pltpu.VMEM((nb, h + 2, w * cin), jnp.bfloat16),      # row-padded input
            pltpu.VMEM((nb, ho + 2, wo * cout), jnp.bfloat16),   # row-padded conv1 out
        ],
        compiler_params=pltpu.CompilerParams(
            dimension_semantics=("parallel",),
            # Raises v5e's 16 MiB default scoped VMEM; well within v6e/v7x limits.
            vmem_limit_bytes=32 * 1024 * 1024,
        ),
    )(*args)
    return out.reshape(n, ho, wo, cout)


def basic_block_forward(params, x_nchw, stride=1):
    """PyTorch-style NCHW f32 interface; layout changes only at entry/exit."""
    x = jnp.transpose(x_nchw, (0, 2, 3, 1))
    y = basic_block_forward_nhwc(params, x, stride)
    return jnp.transpose(y.astype(jnp.float32), (0, 3, 1, 2))


# ---------------------------------------------------------------------------
# Deterministic synthetic parameters
# ---------------------------------------------------------------------------

def init_params(key, in_chan, out_chan, stride=1):
    keys = jax.random.split(key, 16)

    def bn_fold(kg, kb, km, kv, c):
        gamma = 1.0 + 0.1 * jax.random.normal(kg, (c,), jnp.float32)
        beta = 0.1 * jax.random.normal(kb, (c,), jnp.float32)
        mean = 0.1 * jax.random.normal(km, (c,), jnp.float32)
        var = jnp.abs(jax.random.normal(kv, (c,), jnp.float32)) + 0.5
        scale = gamma / jnp.sqrt(var + BN_EPS)
        bias = beta - mean * scale
        return scale, bias

    params = {
        "w1": 0.1 * jax.random.normal(keys[0], (3, 3, in_chan, out_chan), jnp.float32),
        "w2": 0.1 * jax.random.normal(keys[1], (3, 3, out_chan, out_chan), jnp.float32),
    }
    params["bn1_scale"], params["bn1_bias"] = bn_fold(keys[2], keys[3], keys[4], keys[5], out_chan)
    params["bn2_scale"], params["bn2_bias"] = bn_fold(keys[6], keys[7], keys[8], keys[9], out_chan)
    if in_chan != out_chan or stride != 1:
        params["wd"] = 0.1 * jax.random.normal(keys[10], (in_chan, out_chan), jnp.float32)
        params["bnd_scale"], params["bnd_bias"] = bn_fold(keys[11], keys[12], keys[13], keys[14], out_chan)
    return params


# ---------------------------------------------------------------------------
# Pure-JAX reference with matching bf16-matmul / f32-accumulate / bf16-output
# ---------------------------------------------------------------------------

def reference_forward(params, x_nchw, stride=1):
    dn = ("NHWC", "HWIO", "NHWC")
    f32 = jnp.float32
    x = jnp.transpose(x_nchw, (0, 2, 3, 1)).astype(jnp.bfloat16)

    w1 = _fold_bn(params["w1"], params["bn1_scale"]).astype(jnp.bfloat16)
    r = lax.conv_general_dilated(x, w1, (stride, stride), ((1, 1), (1, 1)),
                                 dimension_numbers=dn, preferred_element_type=f32)
    r = jnp.maximum(r + params["bn1_bias"].reshape(1, 1, 1, -1), 0.0)

    w2 = _fold_bn(params["w2"], params["bn2_scale"]).astype(jnp.bfloat16)
    r = lax.conv_general_dilated(r.astype(jnp.bfloat16), w2, (1, 1), ((1, 1), (1, 1)),
                                 dimension_numbers=dn, preferred_element_type=f32)
    r = r + params["bn2_bias"].reshape(1, 1, 1, -1)

    if "wd" in params:
        wd = _fold_bn(params["wd"], params["bnd_scale"]).astype(jnp.bfloat16)
        wd4 = wd.reshape(1, 1, *wd.shape)
        sc = lax.conv_general_dilated(x, wd4, (stride, stride), ((0, 0), (0, 0)),
                                      dimension_numbers=dn, preferred_element_type=f32)
        sc = sc + params["bnd_bias"].reshape(1, 1, 1, -1)
    else:
        sc = x.astype(f32)

    # Match the kernel's bf16 output rounding.
    out = jnp.maximum(sc + r, 0.0).astype(jnp.bfloat16).astype(f32)
    return jnp.transpose(out, (0, 3, 1, 2))


if __name__ == "__main__":
    key = jax.random.PRNGKey(0)
    k_p1, k_x1, k_p2, k_x2 = jax.random.split(key, 4)

    n, h, w = 2, 16, 16

    # Case 1: projection shortcut (in_chan != out_chan), stride 1.
    in_c, out_c, stride = 4, 8, 1
    params = init_params(k_p1, in_c, out_c, stride)
    x = jax.random.normal(k_x1, (n, in_c, h, w), jnp.float32)        # NCHW like PyTorch
    out = jax.block_until_ready(basic_block_forward(params, x, stride))
    ref = reference_forward(params, x, stride)
    assert out.shape == (n, out_c, h, w), out.shape
    err = float(jnp.max(jnp.abs(out - ref)))
    # Output is bf16: allow a couple of output ulps at |out| ~ a few.
    assert err < 5e-2, f"downsample-block max abs error {err}"

    # Case 2: identity shortcut (in_chan == out_chan, stride 1).
    params2 = init_params(k_p2, out_c, out_c, 1)
    x2 = jax.random.normal(k_x2, (n, out_c, h, w), jnp.float32)
    out2 = jax.block_until_ready(basic_block_forward(params2, x2, 1))
    ref2 = reference_forward(params2, x2, 1)
    assert out2.shape == (n, out_c, h, w), out2.shape
    err2 = float(jnp.max(jnp.abs(out2 - ref2)))
    assert err2 < 5e-2, f"identity-block max abs error {err2}"

    print("KERNEL_OK")
</pallas_src>

<mosaic_0001>
module attributes {stable_mosaic.version = 11 : i64} {
  func.func @_basic_block_kernel(%arg0: i32, %arg1: memref<2x16x64xbf16, #tpu.memory_space<vmem>>, %arg2: memref<3x64x128xbf16, #tpu.memory_space<vmem>>, %arg3: memref<1x128xf32, #tpu.memory_space<vmem>>, %arg4: memref<3x128x128xbf16, #tpu.memory_space<vmem>>, %arg5: memref<1x128xf32, #tpu.memory_space<vmem>>, %arg6: memref<64x128xbf16, #tpu.memory_space<vmem>>, %arg7: memref<1x128xf32, #tpu.memory_space<vmem>>, %arg8: memref<2x16x128xbf16, #tpu.memory_space<vmem>>, %arg9: memref<2x18x64xbf16, #tpu.memory_space<vmem>>, %arg10: memref<2x18x128xbf16, #tpu.memory_space<vmem>>) attributes {dimension_semantics = [#tpu.dimension_semantics<parallel>], iteration_bounds = array<i64: 1>, scalar_prefetch = 0 : i64, scratch_operands = 2 : i64, tpu.core_type = #tpu.core_type<tc>, window_params = [{transform_indices = @transform_0, window_bounds = array<i64: 2, 16, 64>}, {pipeline_mode = #tpu.pipeline_mode<synchronous>, transform_indices = @transform_1, window_bounds = array<i64: 3, 64, 128>}, {pipeline_mode = #tpu.pipeline_mode<synchronous>, transform_indices = @transform_2, window_bounds = array<i64: 1, 128>}, {pipeline_mode = #tpu.pipeline_mode<synchronous>, transform_indices = @transform_3, window_bounds = array<i64: 3, 128, 128>}, {pipeline_mode = #tpu.pipeline_mode<synchronous>, transform_indices = @transform_4, window_bounds = array<i64: 1, 128>}, {pipeline_mode = #tpu.pipeline_mode<synchronous>, transform_indices = @transform_5, window_bounds = array<i64: 64, 128>}, {pipeline_mode = #tpu.pipeline_mode<synchronous>, transform_indices = @transform_6, window_bounds = array<i64: 1, 128>}, {transform_indices = @transform_7, window_bounds = array<i64: 2, 16, 128>}]} {
    %c0 = arith.constant 0 : index
    %c0_0 = arith.constant 0 : index
    %c0_1 = arith.constant 0 : index
    %0 = vector.load %arg1[%c0, %c0_0, %c0_1] : memref<2x16x64xbf16, #tpu.memory_space<vmem>>, vector<2x16x64xbf16>
    %cst = arith.constant 0.000000e+00 : bf16
    %1 = vector.broadcast %cst : bf16 to vector<2x1x64xbf16>
    %c0_2 = arith.constant 0 : index
    %c0_3 = arith.constant 0 : index
    %c0_4 = arith.constant 0 : index
    %2 = vector.load %arg9[%c0_2, %c0_3, %c0_4] : memref<2x18x64xbf16, #tpu.memory_space<vmem>>, vector<2x1x64xbf16>
    tpu.vector_store %arg9[%c0_2, %c0_3, %c0_4], %1 {strides = array<i32>} : memref<2x18x64xbf16, #tpu.memory_space<vmem>>, vector<2x1x64xbf16>,
    %c0_5 = arith.constant 0 : index
    %c17 = arith.constant 17 : index
    %c0_6 = arith.constant 0 : index
    %3 = vector.load %arg9[%c0_5, %c17, %c0_6] : memref<2x18x64xbf16, #tpu.memory_space<vmem>>, vector<2x1x64xbf16>
    tpu.vector_store %arg9[%c0_5, %c17, %c0_6], %1 {strides = array<i32>} : memref<2x18x64xbf16, #tpu.memory_space<vmem>>, vector<2x1x64xbf16>,
    %c0_7 = arith.constant 0 : index
    %c1 = arith.constant 1 : index
    %c0_8 = arith.constant 0 : index
    %4 = vector.load %arg9[%c0_7, %c1, %c0_8] : memref<2x18x64xbf16, #tpu.memory_space<vmem>>, vector<2x16x64xbf16>
    tpu.vector_store %arg9[%c0_7, %c1, %c0_8], %0 {strides = array<i32>} : memref<2x18x64xbf16, #tpu.memory_space<vmem>>, vector<2x16x64xbf16>,
    %cst_9 = arith.constant 0.000000e+00 : f32
    %5 = vector.broadcast %cst_9 : f32 to vector<32x128xf32>
    %c0_10 = arith.constant 0 : index
    %c0_11 = arith.constant 0 : index
    %c0_12 = arith.constant 0 : index
    %6 = vector.load %arg9[%c0_10, %c0_11, %c0_12] : memref<2x18x64xbf16, #tpu.memory_space<vmem>>, vector<2x16x64xbf16>
    %7 = vector.shape_cast %6 : vector<2x16x64xbf16> to vector<32x64xbf16>
    %c0_13 = arith.constant 0 : index
    %c0_14 = arith.constant 0 : index
    %c0_15 = arith.constant 0 : index
    %8 = vector.load %arg2[%c0_13, %c0_14, %c0_15] : memref<3x64x128xbf16, #tpu.memory_space<vmem>>, vector<1x64x128xbf16>
    %9 = vector.shape_cast %8 : vector<1x64x128xbf16> to vector<64x128xbf16>
    %cst_16 = arith.constant dense<0.000000e+00> : vector<32x128xf32>
    %10 = tpu.matmul %7, %9, %cst_16 {dimension_numbers = #tpu.dot_dimension_numbers<[1], [0], [0], [1], [0, 0, 1, 1], [], []>} : vector<32x64xbf16>, vector<64x128xbf16>, vector<32x128xf32> -> vector<32x128xf32>
    %11 = arith.addf %5, %10 : vector<32x128xf32>
    %c0_17 = arith.constant 0 : index
    %c1_18 = arith.constant 1 : index
    %c0_19 = arith.constant 0 : index
    %12 = vector.load %arg9[%c0_17, %c1_18, %c0_19] : memref<2x18x64xbf16, #tpu.memory_space<vmem>>, vector<2x16x64xbf16>
    %13 = vector.shape_cast %12 : vector<2x16x64xbf16> to vector<32x64xbf16>
    %c1_20 = arith.constant 1 : index
    %c0_21 = arith.constant 0 : index
    %c0_22 = arith.constant 0 : index
    %14 = vector.load %arg2[%c1_20, %c0_21, %c0_22] : memref<3x64x128xbf16, #tpu.memory_space<vmem>>, vector<1x64x128xbf16>
    %15 = vector.shape_cast %14 : vector<1x64x128xbf16> to vector<64x128xbf16>
    %cst_23 = arith.constant dense<0.000000e+00> : vector<32x128xf32>
    %16 = tpu.matmul %13, %15, %cst_23 {dimension_numbers = #tpu.dot_dimension_numbers<[1], [0], [0], [1], [0, 0, 1, 1], [], []>} : vector<32x64xbf16>, vector<64x128xbf16>, vector<32x128xf32> -> vector<32x128xf32>
    %17 = arith.addf %11, %16 : vector<32x128xf32>
    %c0_24 = arith.constant 0 : index
    %c2 = arith.constant 2 : index
    %c0_25 = arith.constant 0 : index
    %18 = vector.load %arg9[%c0_24, %c2, %c0_25] : memref<2x18x64xbf16, #tpu.memory_space<vmem>>, vector<2x16x64xbf16>
    %19 = vector.shape_cast %18 : vector<2x16x64xbf16> to vector<32x64xbf16>
    %c2_26 = arith.constant 2 : index
    %c0_27 = arith.constant 0 : index
    %c0_28 = arith.constant 0 : index
    %20 = vector.load %arg2[%c2_26, %c0_27, %c0_28] : memref<3x64x128xbf16, #tpu.memory_space<vmem>>, vector<1x64x128xbf16>
    %21 = vector.shape_cast %20 : vector<1x64x128xbf16> to vector<64x128xbf16>
    %cst_29 = arith.constant dense<0.000000e+00> : vector<32x128xf32>
    %22 = tpu.matmul %19, %21, %cst_29 {dimension_numbers = #tpu.dot_dimension_numbers<[1], [0], [0], [1], [0, 0, 1, 1], [], []>} : vector<32x64xbf16>, vector<64x128xbf16>, vector<32x128xf32> -> vector<32x128xf32>
    %23 = arith.addf %17, %22 : vector<32x128xf32>
    %c0_30 = arith.constant 0 : index
    %c0_31 = arith.constant 0 : index
    %24 = vector.load %arg3[%c0_30, %c0_31] : memref<1x128xf32, #tpu.memory_space<vmem>>, vector<1x128xf32>
    %25 = vector.broadcast %24 : vector<1x128xf32> to vector<32x128xf32>
    %26 = arith.addf %23, %25 : vector<32x128xf32>
    %cst_32 = arith.constant 0.000000e+00 : f32
    %27 = vector.broadcast %cst_32 : f32 to vector<32x128xf32>
    %28 = arith.maximumf %26, %27 : vector<32x128xf32>
    %cst_33 = arith.constant 0.000000e+00 : bf16
    %29 = vector.broadcast %cst_33 : bf16 to vector<2x1x128xbf16>
    %c0_34 = arith.constant 0 : index
    %c0_35 = arith.constant 0 : index
    %c0_36 = arith.constant 0 : index
    %30 = vector.load %arg10[%c0_34, %c0_35, %c0_36] : memref<2x18x128xbf16, #tpu.memory_space<vmem>>, vector<2x1x128xbf16>
    tpu.vector_store %arg10[%c0_34, %c0_35, %c0_36], %29 {strides = array<i32>} : memref<2x18x128xbf16, #tpu.memory_space<vmem>>, vector<2x1x128xbf16>,
    %c0_37 = arith.constant 0 : index
    %c17_38 = arith.constant 17 : index
    %c0_39 = arith.constant 0 : index
    %31 = vector.load %arg10[%c0_37, %c17_38, %c0_39] : memref<2x18x128xbf16, #tpu.memory_space<vmem>>, vector<2x1x128xbf16>
    tpu.vector_store %arg10[%c0_37, %c17_38, %c0_39], %29 {strides = array<i32>} : memref<2x18x128xbf16, #tpu.memory_space<vmem>>, vector<2x1x128xbf16>,
    %32 = arith.truncf %28 : vector<32x128xf32> to vector<32x128xbf16>
    %33 = vector.shape_cast %32 : vector<32x128xbf16> to vector<2x16x128xbf16>
    %c0_40 = arith.constant 0 : index
    %c1_41 = arith.constant 1 : index
    %c0_42 = arith.constant 0 : index
    %34 = vector.load %arg10[%c0_40, %c1_41, %c0_42] : memref<2x18x128xbf16, #tpu.memory_space<vmem>>, vector<2x16x128xbf16>
    tpu.vector_store %arg10[%c0_40, %c1_41, %c0_42], %33 {strides = array<i32>} : memref<2x18x128xbf16, #tpu.memory_space<vmem>>, vector<2x16x128xbf16>,
    %cst_43 = arith.constant 0.000000e+00 : f32
    %35 = vector.broadcast %cst_43 : f32 to vector<32x128xf32>
    %c0_44 = arith.constant 0 : index
    %c0_45 = arith.constant 0 : index
    %c0_46 = arith.constant 0 : index
    %36 = vector.load %arg10[%c0_44, %c0_45, %c0_46] : memref<2x18x128xbf16, #tpu.memory_space<vmem>>, vector<2x16x128xbf16>
    %37 = vector.shape_cast %36 : vector<2x16x128xbf16> to vector<32x128xbf16>
    %c0_47 = arith.constant 0 : index
    %c0_48 = arith.constant 0 : index
    %c0_49 = arith.constant 0 : index
    %38 = vector.load %arg4[%c0_47, %c0_48, %c0_49] : memref<3x128x128xbf16, #tpu.memory_space<vmem>>, vector<1x128x128xbf16>
    %39 = vector.shape_cast %38 : vector<1x128x128xbf16> to vector<128x128xbf16>
    %cst_50 = arith.constant dense<0.000000e+00> : vector<32x128xf32>
    %40 = tpu.matmul %37, %39, %cst_50 {dimension_numbers = #tpu.dot_dimension_numbers<[1], [0], [0], [1], [0, 0, 1, 1], [], []>} : vector<32x128xbf16>, vector<128x128xbf16>, vector<32x128xf32> -> vector<32x128xf32>
    %41 = arith.addf %35, %40 : vector<32x128xf32>
    %c0_51 = arith.constant 0 : index
    %c1_52 = arith.constant 1 : index
    %c0_53 = arith.constant 0 : index
    %42 = vector.load %arg10[%c0_51, %c1_52, %c0_53] : memref<2x18x128xbf16, #tpu.memory_space<vmem>>, vector<2x16x128xbf16>
    %43 = vector.shape_cast %42 : vector<2x16x128xbf16> to vector<32x128xbf16>
    %c1_54 = arith.constant 1 : index
    %c0_55 = arith.constant 0 : index
    %c0_56 = arith.constant 0 : index
    %44 = vector.load %arg4[%c1_54, %c0_55, %c0_56] : memref<3x128x128xbf16, #tpu.memory_space<vmem>>, vector<1x128x128xbf16>
    %45 = vector.shape_cast %44 : vector<1x128x128xbf16> to vector<128x128xbf16>
    %cst_57 = arith.constant dense<0.000000e+00> : vector<32x128xf32>
    %46 = tpu.matmul %43, %45, %cst_57 {dimension_numbers = #tpu.dot_dimension_numbers<[1], [0], [0], [1], [0, 0, 1, 1], [], []>} : vector<32x128xbf16>, vector<128x128xbf16>, vector<32x128xf32> -> vector<32x128xf32>
    %47 = arith.addf %41, %46 : vector<32x128xf32>
    %c0_58 = arith.constant 0 : index
    %c2_59 = arith.constant 2 : index
    %c0_60 = arith.constant 0 : index
    %48 = vector.load %arg10[%c0_58, %c2_59, %c0_60] : memref<2x18x128xbf16, #tpu.memory_space<vmem>>, vector<2x16x128xbf16>
    %49 = vector.shape_cast %48 : vector<2x16x128xbf16> to vector<32x128xbf16>
    %c2_61 = arith.constant 2 : index
    %c0_62 = arith.constant 0 : index
    %c0_63 = arith.constant 0 : index
    %50 = vector.load %arg4[%c2_61, %c0_62, %c0_63] : memref<3x128x128xbf16, #tpu.memory_space<vmem>>, vector<1x128x128xbf16>
    %51 = vector.shape_cast %50 : vector<1x128x128xbf16> to vector<128x128xbf16>
    %cst_64 = arith.constant dense<0.000000e+00> : vector<32x128xf32>
    %52 = tpu.matmul %49, %51, %cst_64 {dimension_numbers = #tpu.dot_dimension_numbers<[1], [0], [0], [1], [0, 0, 1, 1], [], []>} : vector<32x128xbf16>, vector<128x128xbf16>, vector<32x128xf32> -> vector<32x128xf32>
    %53 = arith.addf %47, %52 : vector<32x128xf32>
    %c0_65 = arith.constant 0 : index
    %c0_66 = arith.constant 0 : index
    %54 = vector.load %arg5[%c0_65, %c0_66] : memref<1x128xf32, #tpu.memory_space<vmem>>, vector<1x128xf32>
    %55 = vector.broadcast %54 : vector<1x128xf32> to vector<32x128xf32>
    %56 = arith.addf %53, %55 : vector<32x128xf32>
    %57 = vector.shape_cast %0 : vector<2x16x64xbf16> to vector<32x64xbf16>
    %c0_67 = arith.constant 0 : index
    %c0_68 = arith.constant 0 : index
    %58 = vector.load %arg6[%c0_67, %c0_68] : memref<64x128xbf16, #tpu.memory_space<vmem>>, vector<64x128xbf16>
    %cst_69 = arith.constant dense<0.000000e+00> : vector<32x128xf32>
    %59 = tpu.matmul %57, %58, %cst_69 {dimension_numbers = #tpu.dot_dimension_numbers<[1], [0], [0], [1], [0, 0, 1, 1], [], []>} : vector<32x64xbf16>, vector<64x128xbf16>, vector<32x128xf32> -> vector<32x128xf32>
    %c0_70 = arith.constant 0 : index
    %c0_71 = arith.constant 0 : index
    %60 = vector.load %arg7[%c0_70, %c0_71] : memref<1x128xf32, #tpu.memory_space<vmem>>, vector<1x128xf32>
    %61 = vector.broadcast %60 : vector<1x128xf32> to vector<32x128xf32>
    %62 = arith.addf %59, %61 : vector<32x128xf32>
    %63 = arith.addf %56, %62 : vector<32x128xf32>
    %cst_72 = arith.constant 0.000000e+00 : f32
    %64 = vector.broadcast %cst_72 : f32 to vector<32x128xf32>
    %65 = arith.maximumf %63, %64 : vector<32x128xf32>
    %66 = arith.truncf %65 : vector<32x128xf32> to vector<32x128xbf16>
    %67 = vector.shape_cast %66 : vector<32x128xbf16> to vector<2x16x128xbf16>
    %c0_73 = arith.constant 0 : index
    %c0_74 = arith.constant 0 : index
    %c0_75 = arith.constant 0 : index
    %68 = vector.load %arg8[%c0_73, %c0_74, %c0_75] : memref<2x16x128xbf16, #tpu.memory_space<vmem>>, vector<2x16x128xbf16>
    tpu.vector_store %arg8[%c0_73, %c0_74, %c0_75], %67 {strides = array<i32>} : memref<2x16x128xbf16, #tpu.memory_space<vmem>>, vector<2x16x128xbf16>,
    return
  }
  func.func @transform_0(%arg0: i32) -> (i32, i32, i32) {
    %c0_i32 = arith.constant 0 : i32
    %c0_i32_0 = arith.constant 0 : i32
    %c0_i32_1 = arith.constant 0 : i32
    return %arg0, %c0_i32, %c0_i32_0 : i32, i32, i32
  }
  func.func @transform_1(%arg0: i32) -> (i32, i32, i32) {
    %c0_i32 = arith.constant 0 : i32
    %c0_i32_0 = arith.constant 0 : i32
    %c0_i32_1 = arith.constant 0 : i32
    %c0_i32_2 = arith.constant 0 : i32
    return %c0_i32, %c0_i32_0, %c0_i32_1 : i32, i32, i32
  }
  func.func @transform_2(%arg0: i32) -> (i32, i32) {
    %c0_i32 = arith.constant 0 : i32
    %c0_i32_0 = arith.constant 0 : i32
    %c0_i32_1 = arith.constant 0 : i32
    return %c0_i32, %c0_i32_0 : i32, i32
  }
  func.func @transform_3(%arg0: i32) -> (i32, i32, i32) {
    %c0_i32 = arith.constant 0 : i32
    %c0_i32_0 = arith.constant 0 : i32
    %c0_i32_1 = arith.constant 0 : i32
    %c0_i32_2 = arith.constant 0 : i32
    return %c0_i32, %c0_i32_0, %c0_i32_1 : i32, i32, i32
  }
  func.func @transform_4(%arg0: i32) -> (i32, i32) {
    %c0_i32 = arith.constant 0 : i32
    %c0_i32_0 = arith.constant 0 : i32
    %c0_i32_1 = arith.constant 0 : i32
    return %c0_i32, %c0_i32_0 : i32, i32
  }
  func.func @transform_5(%arg0: i32) -> (i32, i32) {
    %c0_i32 = arith.constant 0 : i32
    %c0_i32_0 = arith.constant 0 : i32
    %c0_i32_1 = arith.constant 0 : i32
    return %c0_i32, %c0_i32_0 : i32, i32
  }
  func.func @transform_6(%arg0: i32) -> (i32, i32) {
    %c0_i32 = arith.constant 0 : i32
    %c0_i32_0 = arith.constant 0 : i32
    %c0_i32_1 = arith.constant 0 : i32
    return %c0_i32, %c0_i32_0 : i32, i32
  }
  func.func @transform_7(%arg0: i32) -> (i32, i32, i32) {
    %c0_i32 = arith.constant 0 : i32
    %c0_i32_0 = arith.constant 0 : i32
    %c0_i32_1 = arith.constant 0 : i32
    return %arg0, %c0_i32, %c0_i32_0 : i32, i32, i32
  }
}

</mosaic_0001>

<llo_original>
// kernel: tpu_custom_call.1
$region0: #{tpu_custom_call.1}
  #allocation0 [shape = 'u32[]', space=smem, size = 0x4, offset = 0x4, fixed_abs, tag = 'smem constant byte address 0x4 - core index']
  #allocation1 [shape = 'u32[144,128]{1,0:T(1,128)}', space=vmem, size = 0x12000, scoped, tag = 'internal scratch']
  #allocation2 [shape = 'bf16[2,18,64]{2,1,0:T(8,128)(2,1)}', space=vmem, size = 0x3000, scoped, tag = 'scratch operand']
  #allocation3 [shape = 'bf16[2,18,128]{2,1,0:T(8,128)(2,1)}', space=vmem, size = 0x3000, scoped, tag = 'scratch operand']
  %s0 = inlined_call_operand.hbm [shape: bf16[2,16,64], index: 0, kind: input, shape index: {}]
  %s1 = inlined_call_operand.hbm [shape: bf16[3,64,128], index: 1, kind: input, shape index: {}]
  %s2 = inlined_call_operand.vmem [shape: f32[1,128], index: 2, kind: input, shape index: {}]
  %s3 = inlined_call_operand.hbm [shape: bf16[3,128,128], index: 3, kind: input, shape index: {}]
  %s4 = inlined_call_operand.vmem [shape: f32[1,128], index: 4, kind: input, shape index: {}]
  %s5 = inlined_call_operand.hbm [shape: bf16[64,128], index: 5, kind: input, shape index: {}]
  %s6 = inlined_call_operand.vmem [shape: f32[1,128], index: 6, kind: input, shape index: {}]
  %s7 = inlined_call_operand.hbm [shape: bf16[2,16,128], index: 7, kind: output, shape index: {}]
  %s8 = sld [smem:[#allocation0]]
  $region54: #{tpu_custom_call.1} parent=0
    _
  %s10 = ssub.s32 1, %s8
  %s11 = scalar_select 0, %s10, %s8
  $region1: #{tpu_custom_call.1} parent=0
    #allocation4 [shape = 'u8[8192]{0}', space=vmem, size = 0x2000, scoped, tag = 'input window, operand 0, single buffered']
    #allocation5 [shape = 's32[1]{0}', space=sflag, size = 0x4, scoped, tag = 'scoped memory for tpu_custom_call.1']
    #allocation6 [shape = 's32[1]{0}', space=sflag, size = 0x4, scoped, tag = 'scoped memory for tpu_custom_call.1']
    #allocation7 [shape = 'u8[49152]{0}', space=vmem, size = 0xc000, scoped, tag = 'input window, operand 1, single buffered']
    #allocation8 [shape = 's32[1]{0}', space=sflag, size = 0x4, scoped, tag = 'scoped memory for tpu_custom_call.1']
    #allocation9 [shape = 'u8[98304]{0}', space=vmem, size = 0x18000, scoped, tag = 'input window, operand 3, single buffered']
    #allocation10 [shape = 'u8[16384]{0}', space=vmem, size = 0x4000, scoped, tag = 'input window, operand 5, single buffered']
    #allocation11 [shape = 's32[1]{0}', space=sflag, size = 0x4, scoped, tag = 'scoped memory for tpu_custom_call.1']
    #allocation12 [shape = 'u8[8192]{0}', space=vmem, size = 0x2000, scoped, tag = 'output window, operand 0, single buffered']
    %12 = vsyncpa [#allocation5], 0
    %13 = vsyncpa [#allocation8], 0
    %14 = vsyncpa [#allocation11], 0
    %15 = vsyncpa [#allocation6], 0
    // Predicated region
    $region2: #{tpu_custom_call.1} parent=1 // pred_check
      _
    $region3: #{tpu_custom_call.1} parent=1 // pred_check_branch
      %17 = sbr.rel (0) target = $region5
    $region4: #{tpu_custom_call.1} parent=1 // pred_region
      %s19 = ssub.s32 256, 256
      %20 = vsyncadd [#allocation5], %s19
      %s21 = sshll.u32 [#allocation4], 4
      %s22 = int_to_ptr.vmem [resolvable:$true] %s21
      %27 = dma.hbm_to_vmem [thread:$0]  %s0, 256, %s22, [#allocation5], 64, 64, 4
    $region5: #{tpu_custom_call.1} parent=1 // pred_fallthru
      _
    // Predicated region
    $region6: #{tpu_custom_call.1} parent=1 // pred_check
      _
    $region7: #{tpu_custom_call.1} parent=1 // pred_check_branch
      %29 = sbr.rel (0) target = $region9
    $region8: #{tpu_custom_call.1} parent=1 // pred_region
      %s31 = ssub.s32 1536, 1536
      %32 = vsyncadd [#allocation8], %s31
      %s33 = sshll.u32 [#allocation7], 4
      %s34 = int_to_ptr.vmem [resolvable:$true] %s33
      %39 = dma.hbm_to_vmem [thread:$0]  %s1, 1536, %s34, [#allocation8], 64, 64, 4
    $region9: #{tpu_custom_call.1} parent=1 // pred_fallthru
      _
    // Predicated region
    $region10: #{tpu_custom_call.1} parent=1 // pred_check
      _
    $region11: #{tpu_custom_call.1} parent=1 // pred_check_branch
      %41 = sbr.rel (0) target = $region13
    $region12: #{tpu_custom_call.1} parent=1 // pred_region
      _
    $region13: #{tpu_custom_call.1} parent=1 // pred_fallthru
      _
    // Predicated region
    $region14: #{tpu_custom_call.1} parent=1 // pred_check
      _
    $region15: #{tpu_custom_call.1} parent=1 // pred_check_branch
      %43 = sbr.rel (0) target = $region17
    $region16: #{tpu_custom_call.1} parent=1 // pred_region
      %s45 = ssub.s32 3072, 3072
      %46 = vsyncadd [#allocation8], %s45
      %s47 = sshll.u32 [#allocation9], 4
      %s48 = int_to_ptr.vmem [resolvable:$true] %s47
      %53 = dma.hbm_to_vmem [thread:$0]  %s3, 3072, %s48, [#allocation8], 64, 64, 4
    $region17: #{tpu_custom_call.1} parent=1 // pred_fallthru
      _
    // Predicated region
    $region18: #{tpu_custom_call.1} parent=1 // pred_check
      _
    $region19: #{tpu_custom_call.1} parent=1 // pred_check_branch
      %55 = sbr.rel (0) target = $region21
    $region20: #{tpu_custom_call.1} parent=1 // pred_region
      _
    $region21: #{tpu_custom_call.1} parent=1 // pred_fallthru
      _
    // Predicated region
    $region22: #{tpu_custom_call.1} parent=1 // pred_check
      _
    $region23: #{tpu_custom_call.1} parent=1 // pred_check_branch
      %57 = sbr.rel (0) target = $region25
    $region24: #{tpu_custom_call.1} parent=1 // pred_region
      %s59 = ssub.s32 512, 512
      %60 = vsyncadd [#allocation11], %s59
      %s61 = sshll.u32 [#allocation10], 4
      %s62 = int_to_ptr.vmem [resolvable:$true] %s61
      %67 = dma.hbm_to_vmem [thread:$0]  %s5, 512, %s62, [#allocation11], 64, 64, 4
    $region25: #{tpu_custom_call.1} parent=1 // pred_fallthru
      _
    // Predicated region
    $region26: #{tpu_custom_call.1} parent=1 // pred_check
      _
    $region27: #{tpu_custom_call.1} parent=1 // pred_check_branch
      %69 = sbr.rel (0) target = $region29
    $region28: #{tpu_custom_call.1} parent=1 // pred_region
      _
    $region29: #{tpu_custom_call.1} parent=1 // pred_fallthru
      _
    // Predicated region
    $region30: #{tpu_custom_call.1} parent=1 // pred_check
      _
    $region31: #{tpu_custom_call.1} parent=1 // pred_check_branch
      %71 = sbr.rel (0) target = $region33
    $region32: #{tpu_custom_call.1} parent=1 // pred_region
      %72 = dma.done [#allocation5], 256
    $region33: #{tpu_custom_call.1} parent=1 // pred_fallthru
      _
    // Predicated region
    $region34: #{tpu_custom_call.1} parent=1 // pred_check
      _
    $region35: #{tpu_custom_call.1} parent=1 // pred_check_branch
      %74 = sbr.rel (0) target = $region37
    $region36: #{tpu_custom_call.1} parent=1 // pred_region
      %75 = dma.done [#allocation8], 1536
    $region37: #{tpu_custom_call.1} parent=1 // pred_fallthru
      _
    // Predicated region
    $region38: #{tpu_custom_call.1} parent=1 // pred_check
      _
    $region39: #{tpu_custom_call.1} parent=1 // pred_check_branch
      %77 = sbr.rel (0) target = $region41
    $region40: #{tpu_custom_call.1} parent=1 // pred_region
      %78 = dma.done [#allocation8], 3072
    $region41: #{tpu_custom_call.1} parent=1 // pred_fallthru
      _
    // Predicated region
    $region42: #{tpu_custom_call.1} parent=1 // pred_check
      _
    $region43: #{tpu_custom_call.1} parent=1 // pred_check_branch
      %80 = sbr.rel (0) target = $region45
    $region44: #{tpu_custom_call.1} parent=1 // pred_region
      %81 = dma.done [#allocation11], 512
    $region45: #{tpu_custom_call.1} parent=1 // pred_fallthru
      _
    %v83 = vld [vmem:[#allocation4] sm:$0xf]
    %v84 = vld [vmem:[#allocation4 + $0x4] sm:$0xf]
    %v85 = vld [vmem:[#allocation4 + $0x8] sm:$0xf]
    %v86 = vld [vmem:[#allocation4 + $0xc] sm:$0xf]
    %vm87 = vcmask 516096
    %vm88 = vsmask.f32 256
    %vm89 = vmand %vm87, %vm88
    %v90 = vld [vmem:[#allocation2] sm:$0x1]
    %v91 = vsel %vm89, 0, %v90
    %92 = vst [vmem:[#allocation2] sm:$0x1] %v91
    %v93 = vld [vmem:[#allocation2 + $0xc] sm:$0x1]
    %v94 = vsel %vm89, 0, %v93
    %95 = vst [vmem:[#allocation2 + $0xc] sm:$0x1] %v94
    %vm96 = vsmask.f32 7938
    %vm97 = vmand %vm87, %vm96
    %v98 = vld [vmem:[#allocation2 + $0x8] sm:$0x1]
    %v99 = vsel %vm97, 0, %v98
    %100 = vst [vmem:[#allocation2 + $0x8] sm:$0x1] %v99
    %v101 = vld [vmem:[#allocation2 + $0x14] sm:$0x1]
    %v102 = vsel %vm97, 0, %v101
    %103 = vst [vmem:[#allocation2 + $0x14] sm:$0x1] %v102
    %vm104 = vsmask.f32 4368
    %vm105 = vmor %vm88, %vm104
    %v107 = vshrl.u32 %v83, 16
    %v109 = vrot.slane %v107, 7
    %v110 = vshll.u32 %v83, 16
    %v112 = vor.u32 %v109, %v110
    %v113 = vrot.slane %v109, 4
    %v115 = vshrl.u32 %v84, 16
    %v117 = vrot.slane %v115, 7
    %v118 = vshll.u32 %v84, 16
    %v120 = vor.u32 %v117, %v118
    %v121 = vsel %vm105, %v113, %v120
    %v122 = vrot.slane %v117, 4
    %v124 = vshrl.u32 %v85, 16
    %v126 = vrot.slane %v124, 7
    %v127 = vshll.u32 %v85, 16
    %v129 = vor.u32 %v126, %v127
    %v130 = vrot.slane %v126, 4
    %v132 = vshrl.u32 %v86, 16
    %v134 = vrot.slane %v132, 7
    %v135 = vshll.u32 %v86, 16
    %v137 = vor.u32 %v134, %v135
    %v138 = vsel %vm105, %v130, %v137
    %v139 = vrot.slane %v134, 4
    %vm146 = vcmask 519168
    %vm147 = vmand %vm146, %vm96
    %v148 = vld [vmem:[#allocation2] sm:$0xf]
    %v149 = vsel %vm147, %v112, %v148
    %150 = vst [vmem:[#allocation2] sm:$0xf] %v149
    %vm151 = vcmask 519168
    %152 = vst.msk [vmem:[#allocation2 + $0x4] sm:$0xf] %vm151, %v121
    %v153 = vld [vmem:[#allocation2 + $0x8] sm:$0x1]
    %v154 = vsel %vm89, %v122, %v153
    %155 = vst [vmem:[#allocation2 + $0x8] sm:$0x1] %v154
    %v156 = vld [vmem:[#allocation2 + $0xc] sm:$0xf]
    %v157 = vsel %vm147, %v129, %v156
    %158 = vst [vmem:[#allocation2 + $0xc] sm:$0xf] %v157
    %159 = vst.msk [vmem:[#allocation2 + $0x10] sm:$0xf] %vm151, %v138
    %v160 = vld [vmem:[#allocation2 + $0x14] sm:$0x1]
    %v161 = vsel %vm89, %v139, %v160
    %162 = vst [vmem:[#allocation2 + $0x14] sm:$0x1] %v161
    %v163 = vld [vmem:[#allocation2] sm:$0xf]
    %v164 = vld [vmem:[#allocation2 + $0x4] sm:$0xf]
    %v165 = vld [vmem:[#allocation2 + $0xc] sm:$0xf]
    %v166 = vld [vmem:[#allocation2 + $0x10] sm:$0xf]
    %v167 = vld [vmem:[#allocation7] sm:$0xf]
    %v168 = vld [vmem:[#allocation7 + $0x4] sm:$0xf]
    %v169 = vld [vmem:[#allocation7 + $0x8] sm:$0xf]
    %v170 = vld [vmem:[#allocation7 + $0xc] sm:$0xf]
    %v171 = vld [vmem:[#allocation7 + $0x10] sm:$0xf]
    %v172 = vld [vmem:[#allocation7 + $0x14] sm:$0xf]
    %v173 = vld [vmem:[#allocation7 + $0x18] sm:$0xf]
    %v174 = vld [vmem:[#allocation7 + $0x1c] sm:$0xf]
    %v175 = vld [vmem:[#allocation2 + $0x8] sm:$0x1]
    %v176 = vld [vmem:[#allocation2 + $0x14] sm:$0x1]
    %vm177 = vsmask.f32 3328
    %vm178 = vsmask.f32 7440
    %vm179 = vmor %vm177, %vm178
    %v181 = vshrl.u32 %v163, 16
    %v183 = vrot.slane %v181, 4
    %v184 = vshll.u32 %v163, 16
    %v186 = vrot.slane %v184, 5
    %v187 = vor.u32 %v183, %v186
    %v188 = vrot.slane %v187, 4
    %v190 = vshll.u32 %v164, 16
    %v192 = vrot.slane %v190, 5
    %v193 = vsel %vm179, %v188, %v192
    %v194 = vshrl.u32 %v164, 16
    %v196 = vrot.slane %v194, 4
    %v197 = vor.u32 %v196, %v192
    %v198 = vrot.slane %v197, 4
    %v200 = vshll.u32 %v175, 16
    %v202 = vrot.slane %v200, 5
    %v203 = vsel %vm179, %v198, %v202
    %v205 = vshrl.u32 %v165, 16
    %v207 = vrot.slane %v205, 4
    %v208 = vshll.u32 %v165, 16
    %v210 = vrot.slane %v208, 5
    %v211 = vor.u32 %v207, %v210
    %v212 = vrot.slane %v211, 4
    %v214 = vshll.u32 %v166, 16
    %v216 = vrot.slane %v214, 5
    %v217 = vsel %vm179, %v212, %v216
    %v218 = vshrl.u32 %v166, 16
    %v220 = vrot.slane %v218, 4
    %v221 = vor.u32 %v220, %v216
    %v222 = vrot.slane %v221, 4
    %v224 = vshll.u32 %v176, 16
    %v226 = vrot.slane %v224, 5
    %v227 = vsel %vm179, %v222, %v226
    %s228 = scalar_lea.vmem [#allocation7], 32
    %v229 = vld [vmem:[%s228] sm:$0xf]
    %v230 = vld [vmem:[%s228 + $0x4] sm:$0xf]
    %v231 = vld [vmem:[%s228 + $0x8] sm:$0xf]
    %v232 = vld [vmem:[%s228 + $0xc] sm:$0xf]
    %v233 = vld [vmem:[%s228 + $0x10] sm:$0xf]
    %v234 = vld [vmem:[%s228 + $0x14] sm:$0xf]
    %v235 = vld [vmem:[%s228 + $0x18] sm:$0xf]
    %v236 = vld [vmem:[%s228 + $0x1c] sm:$0xf]
    %v237 = vunpack.c.l.b16 %v193
    %v238 = vunpack.c.l.b16 %v203
    %v239 = vunpack.c.l.b16 %v217
    %v240 = vunpack.c.l.b16 %v227
    %v241 = vpack.c.b16 %v238, %v237
    %v242 = vpack.c.b16 %v240, %v239
    %v251 = vunpack.c.l.b16 %v229
    %v252 = vunpack.c.l.b16 %v230
    %v253 = vunpack.c.l.b16 %v231
    %v254 = vunpack.c.l.b16 %v232
    %v255 = vunpack.c.l.b16 %v233
    %v256 = vunpack.c.l.b16 %v234
    %v257 = vunpack.c.l.b16 %v235
    %v258 = vunpack.c.l.b16 %v236
    %v259 = vpack.c.b16 %v252, %v251
    %v260 = vpack.c.b16 %v254, %v253
    %v261 = vpack.c.b16 %v256, %v255
    %v262 = vpack.c.b16 %v258, %v257
    %vm267 = vcmask 523264
    %v269 = vsel %vm267, %v241, 0
    %v272 = vsel %vm267, %v242, 0
    %274 = vmatprep.subr.bf16.mxu0 0
    %275 = vmatpush1.bf16.msra.mxu0 0
    %276 = vmatprep.subr.bf16.mxu0 0
    %277 = vmatpush1.bf16.msra.mxu0 0
    %278 = vmatprep.subr.bf16.mxu0 0
    %279 = vmatpush1.bf16.msra.mxu0 0
    %280 = vmatprep.subr.bf16.mxu0 0
    %281 = vmatpush1.bf16.msra.mxu0 0
    %282 = vmatprep.subr.bf16.mxu0 0
    %283 = vmatpush1.bf16.msra.mxu0 %v262
    %284 = vmatprep.subr.bf16.mxu0 0
    %285 = vmatpush1.bf16.msra.mxu0 %v261
    %286 = vmatprep.subr.bf16.mxu0 0
    %287 = vmatpush1.bf16.msra.mxu0 %v260
    %288 = vmatprep.subr.bf16.mxu0 0
    %289 = vmatpush1.bf16.msra.mxu0 %v259
    %290 = vmatprep.subr.bf16.mxu0 0
    %291 = vmatpush2.bf16.msra.mxu0 0
    %292 = vmatprep.subr.bf16.mxu0 0
    %293 = vmatpush2.bf16.msra.mxu0 0
    %294 = vmatprep.subr.bf16.mxu0 0
    %295 = vmatpush2.bf16.msra.mxu0 0
    %296 = vmatprep.subr.bf16.mxu0 0
    %297 = vmatpush2.bf16.msra.mxu0 0
    %298 = vmatprep.subr.bf16.mxu0 0
    %299 = vmatpush2.bf16.msra.mxu0 0
    %300 = vmatprep.subr.bf16.mxu0 0
    %301 = vmatpush2.bf16.msra.mxu0 0
    %302 = vmatprep.subr.bf16.mxu0 0
    %303 = vmatpush2.bf16.msra.mxu0 0
    %304 = vmatprep.subr.bf16.mxu0 0
    %305 = vmatpush2.bf16.msra.mxu0 0
    %306 = vmatprep.mubr.bf16.mxu0 0
    %307 = vmatmul.mubr.bf16.gmra.mxu0 %v269
    %v308 = vpop.f32.mrf.mxu0
    %v309 = vadd.f32 0.0, %v308
    %v310 = vpop.f32.mrf.mxu0
    %v311 = vpop.f32.mrf.mxu0
    %v312 = vadd.f32 0.0, %v311
    %v313 = vpop.f32.mrf.mxu0
    %314 = vmatprep.mubr.bf16.mxu0 0
    %315 = vmatmul.mubr.bf16.gmra.mxu0 %v272
    %v316 = vpop.f32.mrf.mxu0
    %v317 = vadd.f32 0.0, %v316
    %v318 = vpop.f32.mrf.mxu0
    %v319 = vpop.f32.mrf.mxu0
    %v320 = vadd.f32 0.0, %v319
    %v321 = vpop.f32.mrf.mxu0
    %322 = vdwg.mxu0
    %v327 = vunpack.c.l.b16 %v163
    %v328 = vunpack.c.l.b16 %v164
    %v329 = vunpack.c.l.b16 %v165
    %v330 = vunpack.c.l.b16 %v166
    %v331 = vpack.c.b16 %v328, %v327
    %v332 = vpack.c.b16 %v330, %v329
    %v341 = vunpack.c.l.b16 %v167
    %v342 = vunpack.c.l.b16 %v168
    %v343 = vunpack.c.l.b16 %v169
    %v344 = vunpack.c.l.b16 %v170
    %v345 = vunpack.c.l.b16 %v171
    %v346 = vunpack.c.l.b16 %v172
    %v347 = vunpack.c.l.b16 %v173
    %v348 = vunpack.c.l.b16 %v174
    %v349 = vpack.c.b16 %v342, %v341
    %v350 = vpack.c.b16 %v344, %v343
    %v351 = vpack.c.b16 %v346, %v345
    %v352 = vpack.c.b16 %v348, %v347
    %v358 = vsel %vm267, %v331, 0
    %v361 = vsel %vm267, %v332, 0
    %363 = vmatprep.subr.bf16.mxu0 0
    %364 = vmatpush1.bf16.msra.mxu0 0
    %365 = vmatprep.subr.bf16.mxu0 0
    %366 = vmatpush1.bf16.msra.mxu0 0
    %367 = vmatprep.subr.bf16.mxu0 0
    %368 = vmatpush1.bf16.msra.mxu0 0
    %369 = vmatprep.subr.bf16.mxu0 0
    %370 = vmatpush1.bf16.msra.mxu0 0
    %371 = vmatprep.subr.bf16.mxu0 0
    %372 = vmatpush1.bf16.msra.mxu0 %v352
    %373 = vmatprep.subr.bf16.mxu0 0
    %374 = vmatpush1.bf16.msra.mxu0 %v351
    %375 = vmatprep.subr.bf16.mxu0 0
    %376 = vmatpush1.bf16.msra.mxu0 %v350
    %377 = vmatprep.subr.bf16.mxu0 0
    %378 = vmatpush1.bf16.msra.mxu0 %v349
    %379 = vmatprep.subr.bf16.mxu0 0
    %380 = vmatpush2.bf16.msra.mxu0 0
    %381 = vmatprep.subr.bf16.mxu0 0
    %382 = vmatpush2.bf16.msra.mxu0 0
    %383 = vmatprep.subr.bf16.mxu0 0
    %384 = vmatpush2.bf16.msra.mxu0 0
    %385 = vmatprep.subr.bf16.mxu0 0
    %386 = vmatpush2.bf16.msra.mxu0 0
    %387 = vmatprep.subr.bf16.mxu0 0
    %388 = vmatpush2.bf16.msra.mxu0 0
    %389 = vmatprep.subr.bf16.mxu0 0
    %390 = vmatpush2.bf16.msra.mxu0 0
    %391 = vmatprep.subr.bf16.mxu0 0
    %392 = vmatpush2.bf16.msra.mxu0 0
    %393 = vmatprep.subr.bf16.mxu0 0
    %394 = vmatpush2.bf16.msra.mxu0 0
    %395 = vmatprep.mubr.bf16.mxu0 0
    %396 = vmatmul.mubr.bf16.gmra.mxu0 %v358
    %v397 = vpop.f32.mrf.mxu0
    %v398 = vadd.f32 %v309, %v397
    %v399 = vpop.f32.mrf.mxu0
    %v400 = vpop.f32.mrf.mxu0
    %v401 = vadd.f32 %v312, %v400
    %v402 = vpop.f32.mrf.mxu0
    %403 = vmatprep.mubr.bf16.mxu0 0
    %404 = vmatmul.mubr.bf16.gmra.mxu0 %v361
    %v405 = vpop.f32.mrf.mxu0
    %v406 = vadd.f32 %v317, %v405
    %v407 = vpop.f32.mrf.mxu0
    %v408 = vpop.f32.mrf.mxu0
    %v409 = vadd.f32 %v320, %v408
    %v410 = vpop.f32.mrf.mxu0
    %411 = vdwg.mxu0
    %v412 = vld [vmem:[#allocation2] sm:$0xe]
    %v413 = vld [vmem:[#allocation2 + $0xc] sm:$0xe]
    %vm418 = vcmask 1042432
    %vm419 = vcmask 1046532
    %vm420 = vmor %vm418, %vm419
    %v421 = vrot.slane %v412, 5
    %v422 = vrot.slane %v421, 4
    %v423 = vrot.slane %v164, 5
    %v424 = vsel %vm420, %v422, %v423
    %v425 = vrot.slane %v423, 4
    %v426 = vrot.slane %v175, 5
    %v427 = vsel %vm420, %v425, %v426
    %v428 = vrot.slane %v413, 5
    %v429 = vrot.slane %v428, 4
    %v430 = vrot.slane %v166, 5
    %v431 = vsel %vm420, %v429, %v430
    %v432 = vrot.slane %v430, 4
    %v433 = vrot.slane %v176, 5
    %v434 = vsel %vm420, %v432, %v433
    %s435 = scalar_lea.vmem [#allocation7], 64
    %v436 = vld [vmem:[%s435] sm:$0xf]
    %v437 = vld [vmem:[%s435 + $0x4] sm:$0xf]
    %v438 = vld [vmem:[%s435 + $0x8] sm:$0xf]
    %v439 = vld [vmem:[%s435 + $0xc] sm:$0xf]
    %v440 = vld [vmem:[%s435 + $0x10] sm:$0xf]
    %v441 = vld [vmem:[%s435 + $0x14] sm:$0xf]
    %v442 = vld [vmem:[%s435 + $0x18] sm:$0xf]
    %v443 = vld [vmem:[%s435 + $0x1c] sm:$0xf]
    %v444 = vunpack.c.l.b16 %v424
    %v445 = vunpack.c.l.b16 %v427
    %v446 = vunpack.c.l.b16 %v431
    %v447 = vunpack.c.l.b16 %v434
    %v448 = vpack.c.b16 %v445, %v444
    %v449 = vpack.c.b16 %v447, %v446
    %v458 = vunpack.c.l.b16 %v436
    %v459 = vunpack.c.l.b16 %v437
    %v460 = vunpack.c.l.b16 %v438
    %v461 = vunpack.c.l.b16 %v439
    %v462 = vunpack.c.l.b16 %v440
    %v463 = vunpack.c.l.b16 %v441
    %v464 = vunpack.c.l.b16 %v442
    %v465 = vunpack.c.l.b16 %v443
    %v466 = vpack.c.b16 %v459, %v458
    %v467 = vpack.c.b16 %v461, %v460
    %v468 = vpack.c.b16 %v463, %v462
    %v469 = vpack.c.b16 %v465, %v464
    %v475 = vsel %vm267, %v448, 0
    %v478 = vsel %vm267, %v449, 0
    %480 = vmatprep.subr.bf16.mxu0 0
    %481 = vmatpush1.bf16.msra.mxu0 0
    %482 = vmatprep.subr.bf16.mxu0 0
    %483 = vmatpush1.bf16.msra.mxu0 0
    %484 = vmatprep.subr.bf16.mxu0 0
    %485 = vmatpush1.bf16.msra.mxu0 0
    %486 = vmatprep.subr.bf16.mxu0 0
    %487 = vmatpush1.bf16.msra.mxu0 0
    %488 = vmatprep.subr.bf16.mxu0 0
    %489 = vmatpush1.bf16.msra.mxu0 %v469
    %490 = vmatprep.subr.bf16.mxu0 0
    %491 = vmatpush1.bf16.msra.mxu0 %v468
    %492 = vmatprep.subr.bf16.mxu0 0
    %493 = vmatpush1.bf16.msra.mxu0 %v467
    %494 = vmatprep.subr.bf16.mxu0 0
    %495 = vmatpush1.bf16.msra.mxu0 %v466
    %496 = vmatprep.subr.bf16.mxu0 0
    %497 = vmatpush2.bf16.msra.mxu0 0
    %498 = vmatprep.subr.bf16.mxu0 0
    %499 = vmatpush2.bf16.msra.mxu0 0
    %500 = vmatprep.subr.bf16.mxu0 0
    %501 = vmatpush2.bf16.msra.mxu0 0
    %502 = vmatprep.subr.bf16.mxu0 0
    %503 = vmatpush2.bf16.msra.mxu0 0
    %504 = vmatprep.subr.bf16.mxu0 0
    %505 = vmatpush2.bf16.msra.mxu0 0
    %506 = vmatprep.subr.bf16.mxu0 0
    %507 = vmatpush2.bf16.msra.mxu0 0
    %508 = vmatprep.subr.bf16.mxu0 0
    %509 = vmatpush2.bf16.msra.mxu0 0
    %510 = vmatprep.subr.bf16.mxu0 0
    %511 = vmatpush2.bf16.msra.mxu0 0
    %512 = vmatprep.mubr.bf16.mxu0 0
    %513 = vmatmul.mubr.bf16.gmra.mxu0 %v475
    %v514 = vpop.f32.mrf.mxu0
    %v515 = vadd.f32 0.0, %v514
    %v516 = vpop.f32.mrf.mxu0
    %v517 = vpop.f32.mrf.mxu0
    %v518 = vadd.f32 0.0, %v517
    %v519 = vpop.f32.mrf.mxu0
    %520 = vmatprep.mubr.bf16.mxu0 0
    %521 = vmatmul.mubr.bf16.gmra.mxu0 %v478
    %v522 = vpop.f32.mrf.mxu0
    %v523 = vadd.f32 0.0, %v522
    %v524 = vpop.f32.mrf.mxu0
    %v525 = vpop.f32.mrf.mxu0
    %v526 = vadd.f32 0.0, %v525
    %v527 = vpop.f32.mrf.mxu0
    %528 = vdwg.mxu0
    %v529 = vadd.f32 %v398, %v515
    %v530 = vadd.f32 %v401, %v518
    %v531 = vadd.f32 %v406, %v523
    %v532 = vadd.f32 %v409, %v526
    %v533 = vld [vmem:[%s2] sm:$0x1]
    %v535 = vlaneseq
    %v536 = vshrl.u32 %v535, 7
    %v537 = vsub.s32 0, %v536
    %v538 = vrot.slane %v533, %v537
    %v540 = vadd.f32 %v529, %v538
    %v541 = vadd.f32 %v530, %v538
    %v542 = vadd.f32 %v531, %v538
    %v543 = vadd.f32 %v532, %v538
    %v544 = vmax.f32 %v540, 0.0
    %v545 = vmax.f32 %v541, 0.0
    %v546 = vmax.f32 %v542, 0.0
    %v547 = vmax.f32 %v543, 0.0
    %vm548 = vcmask 1040384
    %vm549 = vmand %vm548, %vm88
    %v550 = vld [vmem:[#allocation3] sm:$0x1]
    %v551 = vsel %vm549, 0, %v550
    %552 = vst [vmem:[#allocation3] sm:$0x1] %v551
    %v553 = vld [vmem:[#allocation3 + $0xc] sm:$0x1]
    %v554 = vsel %vm549, 0, %v553
    %555 = vst [vmem:[#allocation3 + $0xc] sm:$0x1] %v554
    %vm556 = vmand %vm548, %vm96
    %v557 = vld [vmem:[#allocation3 + $0x8] sm:$0x1]
    %v558 = vsel %vm556, 0, %v557
    %559 = vst [vmem:[#allocation3 + $0x8] sm:$0x1] %v558
    %v560 = vld [vmem:[#allocation3 + $0x14] sm:$0x1]
    %v561 = vsel %vm556, 0, %v560
    %562 = vst [vmem:[#allocation3 + $0x14] sm:$0x1] %v561
    %v563 = vpack.c.bf16 %v545, %v544
    %v564 = vpack.c.bf16 %v547, %v546
    %v567 = vunpack.c.l.b16 %v563
    %v568 = vunpack.c.h.b16 %v563
    %v569 = vunpack.c.l.b16 %v564
    %v570 = vunpack.c.h.b16 %v564
    %v571 = vpack.c.b16 %v567, %v567
    %v572 = vpack.c.b16 %v568, %v568
    %v573 = vpack.c.b16 %v569, %v569
    %v574 = vpack.c.b16 %v570, %v570
    %v576 = vshrl.u32 %v571, 16
    %v578 = vrot.slane %v576, 7
    %v579 = vshll.u32 %v571, 16
    %v581 = vor.u32 %v578, %v579
    %v582 = vrot.slane %v578, 4
    %v584 = vshrl.u32 %v572, 16
    %v586 = vrot.slane %v584, 7
    %v587 = vshll.u32 %v572, 16
    %v589 = vor.u32 %v586, %v587
    %v590 = vsel %vm105, %v582, %v589
    %v591 = vrot.slane %v586, 4
    %v593 = vshrl.u32 %v573, 16
    %v595 = vrot.slane %v593, 7
    %v596 = vshll.u32 %v573, 16
    %v598 = vor.u32 %v595, %v596
    %v599 = vrot.slane %v595, 4
    %v601 = vshrl.u32 %v574, 16
    %v603 = vrot.slane %v601, 7
    %v604 = vshll.u32 %v574, 16
    %v606 = vor.u32 %v603, %v604
    %v607 = vsel %vm105, %v599, %v606
    %v608 = vrot.slane %v603, 4
    %vm615 = vcmask 1043456
    %vm616 = vmand %vm615, %vm96
    %v617 = vld [vmem:[#allocation3] sm:$0xf]
    %v618 = vsel %vm616, %v581, %v617
    %619 = vst [vmem:[#allocation3] sm:$0xf] %v618
    %620 = vst [vmem:[#allocation3 + $0x4] sm:$0xf] %v590
    %v621 = vld [vmem:[#allocation3 + $0x8] sm:$0x1]
    %v622 = vsel %vm549, %v591, %v621
    %623 = vst [vmem:[#allocation3 + $0x8] sm:$0x1] %v622
    %v624 = vld [vmem:[#allocation3 + $0xc] sm:$0xf]
    %v625 = vsel %vm616, %v598, %v624
    %626 = vst [vmem:[#allocation3 + $0xc] sm:$0xf] %v625
    %627 = vst [vmem:[#allocation3 + $0x10] sm:$0xf] %v607
    %v628 = vld [vmem:[#allocation3 + $0x14] sm:$0x1]
    %v629 = vsel %vm549, %v608, %v628
    %630 = vst [vmem:[#allocation3 + $0x14] sm:$0x1] %v629
    %v631 = vld [vmem:[#allocation3] sm:$0xf]
    %v632 = vld [vmem:[#allocation3 + $0x4] sm:$0xf]
    %v633 = vld [vmem:[#allocation3 + $0xc] sm:$0xf]
    %v634 = vld [vmem:[#allocation3 + $0x10] sm:$0xf]
    %v635 = vld [vmem:[#allocation9] sm:$0xf]
    %v636 = vld [vmem:[#allocation9 + $0x4] sm:$0xf]
    %v637 = vld [vmem:[#allocation9 + $0x8] sm:$0xf]
    %v638 = vld [vmem:[#allocation9 + $0xc] sm:$0xf]
    %v639 = vld [vmem:[#allocation9 + $0x10] sm:$0xf]
    %v640 = vld [vmem:[#allocation9 + $0x14] sm:$0xf]
    %v641 = vld [vmem:[#allocation9 + $0x18] sm:$0xf]
    %v642 = vld [vmem:[#allocation9 + $0x1c] sm:$0xf]
    %v643 = vld [vmem:[#allocation9 + $0x20] sm:$0xf]
    %v644 = vld [vmem:[#allocation9 + $0x24] sm:$0xf]
    %v645 = vld [vmem:[#allocation9 + $0x28] sm:$0xf]
    %v646 = vld [vmem:[#allocation9 + $0x2c] sm:$0xf]
    %v647 = vld [vmem:[#allocation9 + $0x30] sm:$0xf]
    %v648 = vld [vmem:[#allocation9 + $0x34] sm:$0xf]
    %v649 = vld [vmem:[#allocation9 + $0x38] sm:$0xf]
    %v650 = vld [vmem:[#allocation9 + $0x3c] sm:$0xf]
    %v651 = vld [vmem:[#allocation3 + $0x8] sm:$0x1]
    %v652 = vld [vmem:[#allocation3 + $0x14] sm:$0x1]
    %v654 = vshrl.u32 %v631, 16
    %v656 = vrot.slane %v654, 4
    %v657 = vshll.u32 %v631, 16
    %v659 = vrot.slane %v657, 5
    %v660 = vor.u32 %v656, %v659
    %v661 = vrot.slane %v660, 4
    %v663 = vshll.u32 %v632, 16
    %v665 = vrot.slane %v663, 5
    %v666 = vsel %vm179, %v661, %v665
    %v667 = vshrl.u32 %v632, 16
    %v669 = vrot.slane %v667, 4
    %v670 = vor.u32 %v669, %v665
    %v671 = vrot.slane %v670, 4
    %v673 = vshll.u32 %v651, 16
    %v675 = vrot.slane %v673, 5
    %v676 = vsel %vm179, %v671, %v675
    %v678 = vshrl.u32 %v633, 16
    %v680 = vrot.slane %v678, 4
    %v681 = vshll.u32 %v633, 16
    %v683 = vrot.slane %v681, 5
    %v684 = vor.u32 %v680, %v683
    %v685 = vrot.slane %v684, 4
    %v687 = vshll.u32 %v634, 16
    %v689 = vrot.slane %v687, 5
    %v690 = vsel %vm179, %v685, %v689
    %v691 = vshrl.u32 %v634, 16
    %v693 = vrot.slane %v691, 4
    %v694 = vor.u32 %v693, %v689
    %v695 = vrot.slane %v694, 4
    %v697 = vshll.u32 %v652, 16
    %v699 = vrot.slane %v697, 5
    %v700 = vsel %vm179, %v695, %v699
    %s701 = scalar_lea.vmem [#allocation9], 64
    %v702 = vld [vmem:[%s701] sm:$0xf]
    %v703 = vld [vmem:[%s701 + $0x4] sm:$0xf]
    %v704 = vld [vmem:[%s701 + $0x8] sm:$0xf]
    %v705 = vld [vmem:[%s701 + $0xc] sm:$0xf]
    %v706 = vld [vmem:[%s701 + $0x10] sm:$0xf]
    %v707 = vld [vmem:[%s701 + $0x14] sm:$0xf]
    %v708 = vld [vmem:[%s701 + $0x18] sm:$0xf]
    %v709 = vld [vmem:[%s701 + $0x1c] sm:$0xf]
    %v710 = vld [vmem:[%s701 + $0x20] sm:$0xf]
    %v711 = vld [vmem:[%s701 + $0x24] sm:$0xf]
    %v712 = vld [vmem:[%s701 + $0x28] sm:$0xf]
    %v713 = vld [vmem:[%s701 + $0x2c] sm:$0xf]
    %v714 = vld [vmem:[%s701 + $0x30] sm:$0xf]
    %v715 = vld [vmem:[%s701 + $0x34] sm:$0xf]
    %v716 = vld [vmem:[%s701 + $0x38] sm:$0xf]
    %v717 = vld [vmem:[%s701 + $0x3c] sm:$0xf]
    %v718 = vunpack.c.l.b16 %v666
    %v719 = vunpack.c.l.b16 %v676
    %v720 = vunpack.c.l.b16 %v690
    %v721 = vunpack.c.l.b16 %v700
    %v722 = vpack.c.b16 %v719, %v718
    %v723 = vpack.c.b16 %v721, %v720
    %v742 = vunpack.c.l.b16 %v702
    %v743 = vunpack.c.l.b16 %v703
    %v744 = vunpack.c.l.b16 %v704
    %v745 = vunpack.c.l.b16 %v705
    %v746 = vunpack.c.l.b16 %v706
    %v747 = vunpack.c.l.b16 %v707
    %v748 = vunpack.c.l.b16 %v708
    %v749 = vunpack.c.l.b16 %v709
    %v750 = vunpack.c.l.b16 %v710
    %v751 = vunpack.c.l.b16 %v711
    %v752 = vunpack.c.l.b16 %v712
    %v753 = vunpack.c.l.b16 %v713
    %v754 = vunpack.c.l.b16 %v714
    %v755 = vunpack.c.l.b16 %v715
    %v756 = vunpack.c.l.b16 %v716
    %v757 = vunpack.c.l.b16 %v717
    %v758 = vpack.c.b16 %v743, %v742
    %v759 = vpack.c.b16 %v745, %v744
    %v760 = vpack.c.b16 %v747, %v746
    %v761 = vpack.c.b16 %v749, %v748
    %v762 = vpack.c.b16 %v751, %v750
    %v763 = vpack.c.b16 %v753, %v752
    %v764 = vpack.c.b16 %v755, %v754
    %v765 = vpack.c.b16 %v757, %v756
    %774 = vmatprep.subr.bf16.mxu0 0
    %775 = vmatpush1.bf16.msra.mxu0 %v765
    %776 = vmatprep.subr.bf16.mxu0 0
    %777 = vmatpush1.bf16.msra.mxu0 %v764
    %778 = vmatprep.subr.bf16.mxu0 0
    %779 = vmatpush1.bf16.msra.mxu0 %v763
    %780 = vmatprep.subr.bf16.mxu0 0
    %781 = vmatpush1.bf16.msra.mxu0 %v762
    %782 = vmatprep.subr.bf16.mxu0 0
    %783 = vmatpush1.bf16.msra.mxu0 %v761
    %784 = vmatprep.subr.bf16.mxu0 0
    %785 = vmatpush1.bf16.msra.mxu0 %v760
    %786 = vmatprep.subr.bf16.mxu0 0
    %787 = vmatpush1.bf16.msra.mxu0 %v759
    %788 = vmatprep.subr.bf16.mxu0 0
    %789 = vmatpush1.bf16.msra.mxu0 %v758
    %790 = vmatprep.subr.bf16.mxu0 0
    %791 = vmatpush2.bf16.msra.mxu0 0
    %792 = vmatprep.subr.bf16.mxu0 0
    %793 = vmatpush2.bf16.msra.mxu0 0
    %794 = vmatprep.subr.bf16.mxu0 0
    %795 = vmatpush2.bf16.msra.mxu0 0
    %796 = vmatprep.subr.bf16.mxu0 0
    %797 = vmatpush2.bf16.msra.mxu0 0
    %798 = vmatprep.subr.bf16.mxu0 0
    %799 = vmatpush2.bf16.msra.mxu0 0
    %800 = vmatprep.subr.bf16.mxu0 0
    %801 = vmatpush2.bf16.msra.mxu0 0
    %802 = vmatprep.subr.bf16.mxu0 0
    %803 = vmatpush2.bf16.msra.mxu0 0
    %804 = vmatprep.subr.bf16.mxu0 0
    %805 = vmatpush2.bf16.msra.mxu0 0
    %806 = vmatprep.mubr.bf16.mxu0 0
    %807 = vmatmul.mubr.bf16.gmra.mxu0 %v722
    %v808 = vpop.f32.mrf.mxu0
    %v809 = vadd.f32 0.0, %v808
    %v810 = vpop.f32.mrf.mxu0
    %v811 = vpop.f32.mrf.mxu0
    %v812 = vadd.f32 0.0, %v811
    %v813 = vpop.f32.mrf.mxu0
    %814 = vmatprep.mubr.bf16.mxu0 0
    %815 = vmatmul.mubr.bf16.gmra.mxu0 %v723
    %v816 = vpop.f32.mrf.mxu0
    %v817 = vadd.f32 0.0, %v816
    %v818 = vpop.f32.mrf.mxu0
    %v819 = vpop.f32.mrf.mxu0
    %v820 = vadd.f32 0.0, %v819
    %v821 = vpop.f32.mrf.mxu0
    %822 = vdwg.mxu0
    %v827 = vunpack.c.l.b16 %v631
    %v828 = vunpack.c.l.b16 %v632
    %v829 = vunpack.c.l.b16 %v633
    %v830 = vunpack.c.l.b16 %v634
    %v831 = vpack.c.b16 %v828, %v827
    %v832 = vpack.c.b16 %v830, %v829
    %v851 = vunpack.c.l.b16 %v635
    %v852 = vunpack.c.l.b16 %v636
    %v853 = vunpack.c.l.b16 %v637
    %v854 = vunpack.c.l.b16 %v638
    %v855 = vunpack.c.l.b16 %v639
    %v856 = vunpack.c.l.b16 %v640
    %v857 = vunpack.c.l.b16 %v641
    %v858 = vunpack.c.l.b16 %v642
    %v859 = vunpack.c.l.b16 %v643
    %v860 = vunpack.c.l.b16 %v644
    %v861 = vunpack.c.l.b16 %v645
    %v862 = vunpack.c.l.b16 %v646
    %v863 = vunpack.c.l.b16 %v647
    %v864 = vunpack.c.l.b16 %v648
    %v865 = vunpack.c.l.b16 %v649
    %v866 = vunpack.c.l.b16 %v650
    %v867 = vpack.c.b16 %v852, %v851
    %v868 = vpack.c.b16 %v854, %v853
    %v869 = vpack.c.b16 %v856, %v855
    %v870 = vpack.c.b16 %v858, %v857
    %v871 = vpack.c.b16 %v860, %v859
    %v872 = vpack.c.b16 %v862, %v861
    %v873 = vpack.c.b16 %v864, %v863
    %v874 = vpack.c.b16 %v866, %v865
    %883 = vmatprep.subr.bf16.mxu0 0
    %884 = vmatpush1.bf16.msra.mxu0 %v874
    %885 = vmatprep.subr.bf16.mxu0 0
    %886 = vmatpush1.bf16.msra.mxu0 %v873
    %887 = vmatprep.subr.bf16.mxu0 0
    %888 = vmatpush1.bf16.msra.mxu0 %v872
    %889 = vmatprep.subr.bf16.mxu0 0
    %890 = vmatpush1.bf16.msra.mxu0 %v871
    %891 = vmatprep.subr.bf16.mxu0 0
    %892 = vmatpush1.bf16.msra.mxu0 %v870
    %893 = vmatprep.subr.bf16.mxu0 0
    %894 = vmatpush1.bf16.msra.mxu0 %v869
    %895 = vmatprep.subr.bf16.mxu0 0
    %896 = vmatpush1.bf16.msra.mxu0 %v868
    %897 = vmatprep.subr.bf16.mxu0 0
    %898 = vmatpush1.bf16.msra.mxu0 %v867
    %899 = vmatprep.subr.bf16.mxu0 0
    %900 = vmatpush2.bf16.msra.mxu0 0
    %901 = vmatprep.subr.bf16.mxu0 0
    %902 = vmatpush2.bf16.msra.mxu0 0
    %903 = vmatprep.subr.bf16.mxu0 0
    %904 = vmatpush2.bf16.msra.mxu0 0
    %905 = vmatprep.subr.bf16.mxu0 0
    %906 = vmatpush2.bf16.msra.mxu0 0
    %907 = vmatprep.subr.bf16.mxu0 0
    %908 = vmatpush2.bf16.msra.mxu0 0
    %909 = vmatprep.subr.bf16.mxu0 0
    %910 = vmatpush2.bf16.msra.mxu0 0
    %911 = vmatprep.subr.bf16.mxu0 0
    %912 = vmatpush2.bf16.msra.mxu0 0
    %913 = vmatprep.subr.bf16.mxu0 0
    %914 = vmatpush2.bf16.msra.mxu0 0
    %915 = vmatprep.mubr.bf16.mxu0 0
    %916 = vmatmul.mubr.bf16.gmra.mxu0 %v831
    %v917 = vpop.f32.mrf.mxu0
    %v918 = vadd.f32 %v809, %v917
    %v919 = vpop.f32.mrf.mxu0
    %v920 = vpop.f32.mrf.mxu0
    %v921 = vadd.f32 %v812, %v920
    %v922 = vpop.f32.mrf.mxu0
    %923 = vmatprep.mubr.bf16.mxu0 0
    %924 = vmatmul.mubr.bf16.gmra.mxu0 %v832
    %v925 = vpop.f32.mrf.mxu0
    %v926 = vadd.f32 %v817, %v925
    %v927 = vpop.f32.mrf.mxu0
    %v928 = vpop.f32.mrf.mxu0
    %v929 = vadd.f32 %v820, %v928
    %v930 = vpop.f32.mrf.mxu0
    %931 = vdwg.mxu0
    %v932 = vld [vmem:[#allocation3] sm:$0xe]
    %v933 = vld [vmem:[#allocation3 + $0xc] sm:$0xe]
    %v938 = vrot.slane %v932, 5
    %v939 = vrot.slane %v938, 4
    %v940 = vrot.slane %v632, 5
    %v941 = vsel %vm420, %v939, %v940
    %v942 = vrot.slane %v940, 4
    %v943 = vrot.slane %v651, 5
    %v944 = vsel %vm420, %v942, %v943
    %v945 = vrot.slane %v933, 5
    %v946 = vrot.slane %v945, 4
    %v947 = vrot.slane %v634, 5
    %v948 = vsel %vm420, %v946, %v947
    %v949 = vrot.slane %v947, 4
    %v950 = vrot.slane %v652, 5
    %v951 = vsel %vm420, %v949, %v950
    %s952 = scalar_lea.vmem [#allocation9], 128
    %v953 = vld [vmem:[%s952] sm:$0xf]
    %v954 = vld [vmem:[%s952 + $0x4] sm:$0xf]
    %v955 = vld [vmem:[%s952 + $0x8] sm:$0xf]
    %v956 = vld [vmem:[%s952 + $0xc] sm:$0xf]
    %v957 = vld [vmem:[%s952 + $0x10] sm:$0xf]
    %v958 = vld [vmem:[%s952 + $0x14] sm:$0xf]
    %v959 = vld [vmem:[%s952 + $0x18] sm:$0xf]
    %v960 = vld [vmem:[%s952 + $0x1c] sm:$0xf]
    %v961 = vld [vmem:[%s952 + $0x20] sm:$0xf]
    %v962 = vld [vmem:[%s952 + $0x24] sm:$0xf]
    %v963 = vld [vmem:[%s952 + $0x28] sm:$0xf]
    %v964 = vld [vmem:[%s952 + $0x2c] sm:$0xf]
    %v965 = vld [vmem:[%s952 + $0x30] sm:$0xf]
    %v966 = vld [vmem:[%s952 + $0x34] sm:$0xf]
    %v967 = vld [vmem:[%s952 + $0x38] sm:$0xf]
    %v968 = vld [vmem:[%s952 + $0x3c] sm:$0xf]
    %v969 = vunpack.c.l.b16 %v941
    %v970 = vunpack.c.l.b16 %v944
    %v971 = vunpack.c.l.b16 %v948
    %v972 = vunpack.c.l.b16 %v951
    %v973 = vpack.c.b16 %v970, %v969
    %v974 = vpack.c.b16 %v972, %v971
    %v993 = vunpack.c.l.b16 %v953
    %v994 = vunpack.c.l.b16 %v954
    %v995 = vunpack.c.l.b16 %v955
    %v996 = vunpack.c.l.b16 %v956
    %v997 = vunpack.c.l.b16 %v957
    %v998 = vunpack.c.l.b16 %v958
    %v999 = vunpack.c.l.b16 %v959
    %v1000 = vunpack.c.l.b16 %v960
    %v1001 = vunpack.c.l.b16 %v961
    %v1002 = vunpack.c.l.b16 %v962
    %v1003 = vunpack.c.l.b16 %v963
    %v1004 = vunpack.c.l.b16 %v964
    %v1005 = vunpack.c.l.b16 %v965
    %v1006 = vunpack.c.l.b16 %v966
    %v1007 = vunpack.c.l.b16 %v967
    %v1008 = vunpack.c.l.b16 %v968
    %v1009 = vpack.c.b16 %v994, %v993
    %v1010 = vpack.c.b16 %v996, %v995
    %v1011 = vpack.c.b16 %v998, %v997
    %v1012 = vpack.c.b16 %v1000, %v999
    %v1013 = vpack.c.b16 %v1002, %v1001
    %v1014 = vpack.c.b16 %v1004, %v1003
    %v1015 = vpack.c.b16 %v1006, %v1005
    %v1016 = vpack.c.b16 %v1008, %v1007
    %1025 = vmatprep.subr.bf16.mxu0 0
    %1026 = vmatpush1.bf16.msra.mxu0 %v1016
    %1027 = vmatprep.subr.bf16.mxu0 0
    %1028 = vmatpush1.bf16.msra.mxu0 %v1015
    %1029 = vmatprep.subr.bf16.mxu0 0
    %1030 = vmatpush1.bf16.msra.mxu0 %v1014
    %1031 = vmatprep.subr.bf16.mxu0 0
    %1032 = vmatpush1.bf16.msra.mxu0 %v1013
    %1033 = vmatprep.subr.bf16.mxu0 0
    %1034 = vmatpush1.bf16.msra.mxu0 %v1012
    %1035 = vmatprep.subr.bf16.mxu0 0
    %1036 = vmatpush1.bf16.msra.mxu0 %v1011
    %1037 = vmatprep.subr.bf16.mxu0 0
    %1038 = vmatpush1.bf16.msra.mxu0 %v1010
    %1039 = vmatprep.subr.bf16.mxu0 0
    %1040 = vmatpush1.bf16.msra.mxu0 %v1009
    %1041 = vmatprep.subr.bf16.mxu0 0
    %1042 = vmatpush2.bf16.msra.mxu0 0
    %1043 = vmatprep.subr.bf16.mxu0 0
    %1044 = vmatpush2.bf16.msra.mxu0 0
    %1045 = vmatprep.subr.bf16.mxu0 0
    %1046 = vmatpush2.bf16.msra.mxu0 0
    %1047 = vmatprep.subr.bf16.mxu0 0
    %1048 = vmatpush2.bf16.msra.mxu0 0
    %1049 = vmatprep.subr.bf16.mxu0 0
    %1050 = vmatpush2.bf16.msra.mxu0 0
    %1051 = vmatprep.subr.bf16.mxu0 0
    %1052 = vmatpush2.bf16.msra.mxu0 0
    %1053 = vmatprep.subr.bf16.mxu0 0
    %1054 = vmatpush2.bf16.msra.mxu0 0
    %1055 = vmatprep.subr.bf16.mxu0 0
    %1056 = vmatpush2.bf16.msra.mxu0 0
    %1057 = vmatprep.mubr.bf16.mxu0 0
    %1058 = vmatmul.mubr.bf16.gmra.mxu0 %v973
    %v1059 = vpop.f32.mrf.mxu0
    %v1060 = vadd.f32 0.0, %v1059
    %v1061 = vpop.f32.mrf.mxu0
    %v1062 = vpop.f32.mrf.mxu0
    %v1063 = vadd.f32 0.0, %v1062
    %v1064 = vpop.f32.mrf.mxu0
    %1065 = vmatprep.mubr.bf16.mxu0 0
    %1066 = vmatmul.mubr.bf16.gmra.mxu0 %v974
    %v1067 = vpop.f32.mrf.mxu0
    %v1068 = vadd.f32 0.0, %v1067
    %v1069 = vpop.f32.mrf.mxu0
    %v1070 = vpop.f32.mrf.mxu0
    %v1071 = vadd.f32 0.0, %v1070
    %v1072 = vpop.f32.mrf.mxu0
    %1073 = vdwg.mxu0
    %v1074 = vadd.f32 %v918, %v1060
    %v1075 = vadd.f32 %v921, %v1063
    %v1076 = vadd.f32 %v926, %v1068
    %v1077 = vadd.f32 %v929, %v1071
    %v1078 = vld [vmem:[%s4] sm:$0x1]
    %v1080 = vlaneseq
    %v1081 = vshrl.u32 %v1080, 7
    %v1082 = vsub.s32 0, %v1081
    %v1083 = vrot.slane %v1078, %v1082
    %v1085 = vadd.f32 %v1074, %v1083
    %v1086 = vadd.f32 %v1075, %v1083
    %v1087 = vadd.f32 %v1076, %v1083
    %v1088 = vadd.f32 %v1077, %v1083
    %v1089 = vld [vmem:[#allocation10] sm:$0xf]
    %v1090 = vld [vmem:[#allocation10 + $0x4] sm:$0xf]
    %v1091 = vld [vmem:[#allocation10 + $0x8] sm:$0xf]
    %v1092 = vld [vmem:[#allocation10 + $0xc] sm:$0xf]
    %v1093 = vld [vmem:[#allocation10 + $0x10] sm:$0xf]
    %v1094 = vld [vmem:[#allocation10 + $0x14] sm:$0xf]
    %v1095 = vld [vmem:[#allocation10 + $0x18] sm:$0xf]
    %v1096 = vld [vmem:[#allocation10 + $0x1c] sm:$0xf]
    %v1097 = vld [vmem:[%s6] sm:$0x1]
    %v1099 = vlaneseq
    %v1100 = vshrl.u32 %v1099, 7
    %v1101 = vsub.s32 0, %v1100
    %v1102 = vrot.slane %v1097, %v1101
    %v1108 = vunpack.c.l.b16 %v83
    %v1109 = vunpack.c.l.b16 %v84
    %v1110 = vunpack.c.l.b16 %v85
    %v1111 = vunpack.c.l.b16 %v86
    %v1112 = vpack.c.b16 %v1109, %v1108
    %v1113 = vpack.c.b16 %v1111, %v1110
    %v1122 = vunpack.c.l.b16 %v1089
    %v1123 = vunpack.c.l.b16 %v1090
    %v1124 = vunpack.c.l.b16 %v1091
    %v1125 = vunpack.c.l.b16 %v1092
    %v1126 = vunpack.c.l.b16 %v1093
    %v1127 = vunpack.c.l.b16 %v1094
    %v1128 = vunpack.c.l.b16 %v1095
    %v1129 = vunpack.c.l.b16 %v1096
    %v1130 = vpack.c.b16 %v1123, %v1122
    %v1131 = vpack.c.b16 %v1125, %v1124
    %v1132 = vpack.c.b16 %v1127, %v1126
    %v1133 = vpack.c.b16 %v1129, %v1128
    %v1139 = vsel %vm267, %v1112, 0
    %v1142 = vsel %vm267, %v1113, 0
    %1144 = vmatprep.subr.bf16.mxu0 0
    %1145 = vmatpush1.bf16.msra.mxu0 0
    %1146 = vmatprep.subr.bf16.mxu0 0
    %1147 = vmatpush1.bf16.msra.mxu0 0
    %1148 = vmatprep.subr.bf16.mxu0 0
    %1149 = vmatpush1.bf16.msra.mxu0 0
    %1150 = vmatprep.subr.bf16.mxu0 0
    %1151 = vmatpush1.bf16.msra.mxu0 0
    %1152 = vmatprep.subr.bf16.mxu0 0
    %1153 = vmatpush1.bf16.msra.mxu0 %v1133
    %1154 = vmatprep.subr.bf16.mxu0 0
    %1155 = vmatpush1.bf16.msra.mxu0 %v1132
    %1156 = vmatprep.subr.bf16.mxu0 0
    %1157 = vmatpush1.bf16.msra.mxu0 %v1131
    %1158 = vmatprep.subr.bf16.mxu0 0
    %1159 = vmatpush1.bf16.msra.mxu0 %v1130
    %1160 = vmatprep.subr.bf16.mxu0 0
    %1161 = vmatpush2.bf16.msra.mxu0 0
    %1162 = vmatprep.subr.bf16.mxu0 0
    %1163 = vmatpush2.bf16.msra.mxu0 0
    %1164 = vmatprep.subr.bf16.mxu0 0
    %1165 = vmatpush2.bf16.msra.mxu0 0
    %1166 = vmatprep.subr.bf16.mxu0 0
    %1167 = vmatpush2.bf16.msra.mxu0 0
    %1168 = vmatprep.subr.bf16.mxu0 0
    %1169 = vmatpush2.bf16.msra.mxu0 0
    %1170 = vmatprep.subr.bf16.mxu0 0
    %1171 = vmatpush2.bf16.msra.mxu0 0
    %1172 = vmatprep.subr.bf16.mxu0 0
    %1173 = vmatpush2.bf16.msra.mxu0 0
    %1174 = vmatprep.subr.bf16.mxu0 0
    %1175 = vmatpush2.bf16.msra.mxu0 0
    %1176 = vmatprep.mubr.bf16.mxu0 0
    %1177 = vmatmul.mubr.bf16.gmra.mxu0 %v1139
    %v1178 = vpop.f32.mrf.mxu0
    %v1179 = vadd.f32 %v1102, %v1178
    %v1180 = vpop.f32.mrf.mxu0
    %v1181 = vpop.f32.mrf.mxu0
    %v1182 = vadd.f32 %v1102, %v1181
    %v1183 = vpop.f32.mrf.mxu0
    %1184 = vmatprep.mubr.bf16.mxu0 0
    %1185 = vmatmul.mubr.bf16.gmra.mxu0 %v1142
    %v1186 = vpop.f32.mrf.mxu0
    %v1187 = vadd.f32 %v1102, %v1186
    %v1188 = vpop.f32.mrf.mxu0
    %v1189 = vpop.f32.mrf.mxu0
    %v1190 = vadd.f32 %v1102, %v1189
    %v1191 = vpop.f32.mrf.mxu0
    %1192 = vdwg.mxu0
    %v1193 = vadd.f32 %v1085, %v1179
    %v1194 = vadd.f32 %v1086, %v1182
    %v1195 = vadd.f32 %v1087, %v1187
    %v1196 = vadd.f32 %v1088, %v1190
    %v1197 = vmax.f32 %v1193, 0.0
    %v1198 = vmax.f32 %v1194, 0.0
    %v1199 = vmax.f32 %v1195, 0.0
    %v1200 = vmax.f32 %v1196, 0.0
    %v1201 = vpack.c.bf16 %v1198, %v1197
    %v1202 = vpack.c.bf16 %v1200, %v1199
    %v1205 = vunpack.c.l.b16 %v1201
    %v1206 = vunpack.c.h.b16 %v1201
    %v1207 = vunpack.c.l.b16 %v1202
    %v1208 = vunpack.c.h.b16 %v1202
    %v1209 = vpack.c.b16 %v1205, %v1205
    %v1210 = vpack.c.b16 %v1206, %v1206
    %v1211 = vpack.c.b16 %v1207, %v1207
    %v1212 = vpack.c.b16 %v1208, %v1208
    %1217 = vst [vmem:[#allocation12] sm:$0xf] %v1209
    %1218 = vst [vmem:[#allocation12 + $0x4] sm:$0xf] %v1210
    %1219 = vst [vmem:[#allocation12 + $0x8] sm:$0xf] %v1211
    %1220 = vst [vmem:[#allocation12 + $0xc] sm:$0xf] %v1212
    // Predicated region
    $region46: #{tpu_custom_call.1} parent=1 // pred_check
      _
    $region47: #{tpu_custom_call.1} parent=1 // pred_check_branch
      %1222 = sbr.rel (0) target = $region49
    $region48: #{tpu_custom_call.1} parent=1 // pred_region
      %s1224 = ssub.s32 256, 256
      %1225 = vsyncadd [#allocation6], %s1224
      %s1226 = sshll.u32 [#allocation12], 4
      %s1227 = int_to_ptr.vmem [resolvable:$true] %s1226
      %1232 = dma.vmem_to_hbm [thread:$0]  %s1227, 256, %s7, [#allocation6], 64, 64, 4
    $region49: #{tpu_custom_call.1} parent=1 // pred_fallthru
      _
    // Predicated region
    $region50: #{tpu_custom_call.1} parent=1 // pred_check
      _
    $region51: #{tpu_custom_call.1} parent=1 // pred_check_branch
      %1234 = sbr.rel (0) target = $region53
    $region52: #{tpu_custom_call.1} parent=1 // pred_region
      %1235 = dma.done [#allocation6], 256
    $region53: #{tpu_custom_call.1} parent=1 // pred_fallthru
      _
    %1236 = vsyncpa [#allocation5], 1
    %1237 = vsyncpa [#allocation8], 1
    %1238 = vsyncpa [#allocation11], 1
    %1239 = vsyncpa [#allocation6], 1

</llo_original>
